<compile_context>
chip_gen: v5e
topology: v5e:2x2
jax: 0.10.0
libtpu: 0.0.40
codegen_flags: <defaults>
</compile_context>

<pallas_src>
import jax
import jax.numpy as jnp
from jax.experimental import pallas as pl
from jax.experimental.pallas import tpu as pltpu

IN_FEATURES = 10 * 5   # 50
OUT_FEATURES = 3
DEFAULT_TB = 8192      # batch tile (multiple of 8); safe on v5e/v6e/v7x


def _round_up(n, m):
    return ((n + m - 1) // m) * m


def linear_kernel(x_ref, wt_ref, b_ref, o_ref):
    # x_ref: (TB, 50), wt_ref: (50, 3), b_ref: (1, 3), o_ref: (TB, 3)
    acc = jnp.dot(x_ref[...], wt_ref[...], preferred_element_type=jnp.float32)
    o_ref[...] = (acc + b_ref[...]).astype(o_ref.dtype)


def prepare_params(weight, bias):
    """One-time param prep: PyTorch (3, 50) weight -> (50, 3); bias -> (1, 3)."""
    wt = jnp.asarray(weight).T.astype(jnp.float32)          # (50, 3)
    b2 = jnp.asarray(bias).reshape(1, OUT_FEATURES).astype(jnp.float32)
    return wt, b2


def mlp_forward(x, wt, b2, *, tb=DEFAULT_TB):
    """x: (B, 50) f32; wt: (50, 3) f32; b2: (1, 3) f32  ->  (B, 3) f32."""
    B = x.shape[0]
    # Tile size: multiple of 8 (sublane), never larger than needed for B.
    TB = min(tb, _round_up(B, 8))
    # Pad batch to a multiple of TB so every block is full (padding rows are
    # computed and then sliced away; zero rows are harmless).
    B_pad = _round_up(B, TB)
    x_in = x if B_pad == B else jnp.pad(x, ((0, B_pad - B), (0, 0)))

    out = pl.pallas_call(
        linear_kernel,
        out_shape=jax.ShapeDtypeStruct((B_pad, OUT_FEATURES), jnp.float32),
        grid_spec=pl.GridSpec(
            grid=(B_pad // TB,),
            in_specs=[
                # x streamed per batch tile (double-buffered by Pallas).
                pl.BlockSpec((TB, IN_FEATURES), lambda i: (i, 0)),
                # weight / bias: same block every step -> VMEM-resident.
                pl.BlockSpec((IN_FEATURES, OUT_FEATURES), lambda i: (0, 0)),
                pl.BlockSpec((1, OUT_FEATURES), lambda i: (0, 0)),
            ],
            out_specs=pl.BlockSpec((TB, OUT_FEATURES), lambda i: (i, 0)),
        ),
        compiler_params=pltpu.CompilerParams(
            dimension_semantics=("parallel",),          # megacore on v7x
            vmem_limit_bytes=48 * 1024 * 1024,          # <= 64 MiB (v7x physical)
        ),
    )(x_in, wt, b2)

    return out if B_pad == B else out[:B]


def init_params(key):
    # Mimic PyTorch nn.Linear default init: U(-1/sqrt(fan_in), 1/sqrt(fan_in)).
    kw, kb = jax.random.split(key)
    bound = 1.0 / jnp.sqrt(float(IN_FEATURES))
    weight = jax.random.uniform(kw, (OUT_FEATURES, IN_FEATURES),
                                jnp.float32, -bound, bound)
    bias = jax.random.uniform(kb, (OUT_FEATURES,), jnp.float32, -bound, bound)
    return weight, bias


if __name__ == "__main__":
    key = jax.random.PRNGKey(0)
    kx, kx2, kp = jax.random.split(key, 3)

    weight, bias = init_params(kp)
    wt, b2 = prepare_params(weight, bias)   # precompute once, reuse per call

    # Small primary test (matches the module's expected usage).
    batch = 8
    x = jax.random.normal(kx, (batch, IN_FEATURES), jnp.float32)
    out = jax.block_until_ready(mlp_forward(x, wt, b2))
    ref = x @ weight.T + bias
    assert out.shape == (batch, OUT_FEATURES)
    assert jnp.allclose(out, ref, atol=1e-5, rtol=1e-5)

    # Secondary test: batch not a multiple of the tile/sublane (exercises padding).
    batch2 = 20
    x2 = jax.random.normal(kx2, (batch2, IN_FEATURES), jnp.float32)
    out2 = jax.block_until_ready(mlp_forward(x2, wt, b2))
    ref2 = x2 @ weight.T + bias
    assert out2.shape == (batch2, OUT_FEATURES)
    assert jnp.allclose(out2, ref2, atol=1e-5, rtol=1e-5)

    print("KERNEL_OK")
</pallas_src>

<mosaic_0001>
module attributes {stable_mosaic.version = 11 : i64} {
  func.func @linear_kernel(%arg0: i32, %arg1: memref<8x50xf32, #tpu.memory_space<vmem>>, %arg2: memref<50x3xf32, #tpu.memory_space<vmem>>, %arg3: memref<1x3xf32, #tpu.memory_space<vmem>>, %arg4: memref<8x3xf32, #tpu.memory_space<vmem>>) attributes {dimension_semantics = [#tpu.dimension_semantics<parallel>], iteration_bounds = array<i64: 1>, scalar_prefetch = 0 : i64, scratch_operands = 0 : i64, tpu.core_type = #tpu.core_type<tc>, window_params = [{transform_indices = @transform_0, window_bounds = array<i64: 8, 50>}, {pipeline_mode = #tpu.pipeline_mode<synchronous>, transform_indices = @transform_1, window_bounds = array<i64: 50, 3>}, {pipeline_mode = #tpu.pipeline_mode<synchronous>, transform_indices = @transform_2, window_bounds = array<i64: 1, 3>}, {transform_indices = @transform_3, window_bounds = array<i64: 8, 3>}]} {
    %c0 = arith.constant 0 : index
    %c0_0 = arith.constant 0 : index
    %0 = vector.load %arg1[%c0, %c0_0] : memref<8x50xf32, #tpu.memory_space<vmem>>, vector<8x50xf32>
    %c0_1 = arith.constant 0 : index
    %c0_2 = arith.constant 0 : index
    %1 = vector.load %arg2[%c0_1, %c0_2] : memref<50x3xf32, #tpu.memory_space<vmem>>, vector<50x3xf32>
    %cst = arith.constant dense<0.000000e+00> : vector<8x3xf32>
    %2 = tpu.matmul %0, %1, %cst {dimension_numbers = #tpu.dot_dimension_numbers<[1], [0], [0], [1], [0, 0, 1, 1], [], []>} : vector<8x50xf32>, vector<50x3xf32>, vector<8x3xf32> -> vector<8x3xf32>
    %c0_3 = arith.constant 0 : index
    %c0_4 = arith.constant 0 : index
    %3 = vector.load %arg3[%c0_3, %c0_4] : memref<1x3xf32, #tpu.memory_space<vmem>>, vector<1x3xf32>
    %4 = vector.broadcast %3 : vector<1x3xf32> to vector<8x3xf32>
    %5 = arith.addf %2, %4 : vector<8x3xf32>
    %c0_5 = arith.constant 0 : index
    %c0_6 = arith.constant 0 : index
    %6 = vector.load %arg4[%c0_5, %c0_6] : memref<8x3xf32, #tpu.memory_space<vmem>>, vector<8x3xf32>
    tpu.vector_store %arg4[%c0_5, %c0_6], %5 {strides = array<i32>} : memref<8x3xf32, #tpu.memory_space<vmem>>, vector<8x3xf32>,
    return
  }
  func.func @transform_0(%arg0: i32) -> (i32, i32) {
    %c0_i32 = arith.constant 0 : i32
    %c0_i32_0 = arith.constant 0 : i32
    return %arg0, %c0_i32 : i32, i32
  }
  func.func @transform_1(%arg0: i32) -> (i32, i32) {
    %c0_i32 = arith.constant 0 : i32
    %c0_i32_0 = arith.constant 0 : i32
    %c0_i32_1 = arith.constant 0 : i32
    return %c0_i32, %c0_i32_0 : i32, i32
  }
  func.func @transform_2(%arg0: i32) -> (i32, i32) {
    %c0_i32 = arith.constant 0 : i32
    %c0_i32_0 = arith.constant 0 : i32
    %c0_i32_1 = arith.constant 0 : i32
    return %c0_i32, %c0_i32_0 : i32, i32
  }
  func.func @transform_3(%arg0: i32) -> (i32, i32) {
    %c0_i32 = arith.constant 0 : i32
    %c0_i32_0 = arith.constant 0 : i32
    return %arg0, %c0_i32 : i32, i32
  }
}

</mosaic_0001>

<llo_original>
// kernel: tpu_custom_call.1
$region0: #{tpu_custom_call.1}
  #allocation0 [shape = 'u32[]', space=smem, size = 0x4, offset = 0x4, fixed_abs, tag = 'smem constant byte address 0x4 - core index']
  #allocation1 [shape = 'u32[72,128]{1,0:T(1,128)}', space=vmem, size = 0x9000, scoped, tag = 'internal scratch']
  %s0 = inlined_call_operand.vmem [shape: f32[8,50], index: 0, kind: input, shape index: {}]
  %s1 = inlined_call_operand.vmem [shape: f32[50,3], index: 1, kind: input, shape index: {}]
  %s2 = inlined_call_operand.vmem [shape: f32[1,3], index: 2, kind: input, shape index: {}]
  %s3 = inlined_call_operand.vmem [shape: f32[8,3], index: 3, kind: output, shape index: {}]
  %s4 = sld [smem:[#allocation0]]
  $region22: #{tpu_custom_call.1} parent=0
    _
  %s6 = ssub.s32 1, %s4
  %s7 = scalar_select 0, %s6, %s4
  // Predicated region
  $region2: #{tpu_custom_call.1} parent=0 // pred_check
    _
  $region3: #{tpu_custom_call.1} parent=0 // pred_check_branch
    %9 = sbr.rel (0) target = $region5
  $region4: #{tpu_custom_call.1} parent=0 // pred_region
    _
  $region5: #{tpu_custom_call.1} parent=0 // pred_fallthru
    _
  // Predicated region
  $region6: #{tpu_custom_call.1} parent=0 // pred_check
    _
  $region7: #{tpu_custom_call.1} parent=0 // pred_check_branch
    %11 = sbr.rel (0) target = $region9
  $region8: #{tpu_custom_call.1} parent=0 // pred_region
    _
  $region9: #{tpu_custom_call.1} parent=0 // pred_fallthru
    _
  // Predicated region
  $region10: #{tpu_custom_call.1} parent=0 // pred_check
    _
  $region11: #{tpu_custom_call.1} parent=0 // pred_check_branch
    %13 = sbr.rel (0) target = $region13
  $region12: #{tpu_custom_call.1} parent=0 // pred_region
    _
  $region13: #{tpu_custom_call.1} parent=0 // pred_fallthru
    _
  %v14 = vld [vmem:[%s0] sm:$0xff]
  %v15 = vld [vmem:[%s1] sm:$0xff]
  %v16 = vld [vmem:[%s1 + $0x8] sm:$0xff]
  %v17 = vld [vmem:[%s1 + $0x10] sm:$0xff]
  %v18 = vld [vmem:[%s1 + $0x18] sm:$0xff]
  %v19 = vld [vmem:[%s1 + $0x20] sm:$0xff]
  %v20 = vld [vmem:[%s1 + $0x28] sm:$0xff]
  %v21 = vld [vmem:[%s1 + $0x30] sm:$0x3]
  %v22 = vld [vmem:[%s2] sm:$0x1]
  %v24 = vperm.slane %v22, 0
  %vm26 = vcmask 408576
  %v28 = vsel %vm26, %v14, 0
  %vm30 = vcmask 1041408
  %v32 = vsel %vm30, %v21, 0
  %34 = vmatpush.msra.mxu0 0.0
  %35 = vmatpush.msra.mxu0 0.0
  %36 = vmatpush.msra.mxu0 0.0
  %37 = vmatpush.msra.mxu0 0.0
  %38 = vmatpush.msra.mxu0 0.0
  %39 = vmatpush.msra.mxu0 0.0
  %40 = vmatpush.msra.mxu0 0.0
  %41 = vmatpush.msra.mxu0 0.0
  %42 = vmatpush.msra.mxu0 0.0
  %43 = vmatpush.msra.mxu0 %v32
  %44 = vmatpush.msra.mxu0 %v20
  %45 = vmatpush.msra.mxu0 %v19
  %46 = vmatpush.msra.mxu0 %v18
  %47 = vmatpush.msra.mxu0 %v17
  %48 = vmatpush.msra.mxu0 %v16
  %49 = vmatpush.msra.mxu0 %v15
  %50 = vmatmul.f32.gmra.mxu0 %v28
  %v51 = vpop.f32.mrf.mxu0
  %v52 = vadd.f32 %v24, %v51
  %53 = vdwg.mxu0
  %vm54 = vcmask 23552
  %55 = vst.msk [vmem:[%s3] sm:$0xff] %vm54, %v52
  // Predicated region
  $region14: #{tpu_custom_call.1} parent=0 // pred_check
    _
  $region15: #{tpu_custom_call.1} parent=0 // pred_check_branch
    %57 = sbr.rel (0) target = $region17
  $region16: #{tpu_custom_call.1} parent=0 // pred_region
    _
  $region17: #{tpu_custom_call.1} parent=0 // pred_fallthru
    _
  // Predicated region
  $region18: #{tpu_custom_call.1} parent=0 // pred_check
    _
  $region19: #{tpu_custom_call.1} parent=0 // pred_check_branch
    %59 = sbr.rel (0) target = $region21
  $region20: #{tpu_custom_call.1} parent=0 // pred_region
    _
  $region21: #{tpu_custom_call.1} parent=0 // pred_fallthru
    _

</llo_original>
